<compile_context>
chip_gen: v5e
topology: v5e:2x2
jax: 0.10.0
libtpu: 0.0.40
codegen_flags: <defaults>
</compile_context>

<pallas_src>
import jax
import jax.numpy as jnp
from jax.experimental import pallas as pl
from jax.experimental.pallas import tpu as pltpu


def _make_kernel(binary_targets: bool):
    """Kernel over one (TH, W) tile of channel-0 data for one batch element."""

    def kernel(pred_ref, true_ref, sum_ref, cnt_ref):
        # Refs are (TH, W): batch/channel (and the per-core output slot) dims
        # are squeezed away by the BlockSpec `None` entries.

        # Zero this core's resident accumulators at its first grid step.
        @pl.when(jnp.logical_and(pl.program_id(1) == 0, pl.program_id(2) == 0))
        def _init():
            sum_ref[...] = jnp.zeros_like(sum_ref)
            cnt_ref[...] = jnp.zeros_like(cnt_ref)

        p = pred_ref[...].astype(jnp.float32)   # pred_mask tile
        t = true_ref[...].astype(jnp.float32)   # true_mask tile

        # torch.nonzero(pred_mask) selection, fused: one compare + one cast.
        nzf = (p != 0.0).astype(jnp.float32)

        if binary_targets:
            # Single-log variant (valid only for hard 0/1 targets): halves EUP work.
            q = jnp.where(t > 0.5, p, 1.0 - p)
            per_elem = -jnp.maximum(jnp.log(q), -100.0)
        else:
            # General BCE with PyTorch's clamp of log() at -100 (soft targets OK).
            log_p = jnp.maximum(jnp.log(p), -100.0)
            log_1mp = jnp.maximum(jnp.log(1.0 - p), -100.0)
            per_elem = -(t * log_p + (1.0 - t) * log_1mp)

        # Element-wise (VPU) accumulation into tile-shaped partials; the single
        # cross-lane reduction happens once, outside the kernel.
        sum_ref[...] = sum_ref[...] + per_elem * nzf
        cnt_ref[...] = cnt_ref[...] + nzf

    return kernel


def _pick_row_tile(H, W, max_tile_bytes=2 << 20):
    """Largest row tile TH that divides H, is a multiple of 8 (or full H), and
    keeps a (TH, W) f32 tile under ~max_tile_bytes so double-buffered inputs +
    resident accumulators fit comfortably in VMEM on every TPU generation
    (incl. v7x's 64 MiB)."""
    if H % 8 != 0:
        # TODO(synk): very large H not divisible by 8 would need padding; full-H
        # block is always legal and fine for typical image sizes.
        return H
    max_rows = max(8, (max_tile_bytes // (4 * W)) // 8 * 8)
    if H <= max_rows:
        return H
    th = max_rows
    while th >= 8:
        if H % th == 0:
            return th
        th -= 8
    return H


def fakes_loss(inputs, target, *, binary_targets: bool = False):
    """inputs/target: NCHW float arrays, same layout as the PyTorch module."""
    B, C, H, W = inputs.shape
    assert target.shape == inputs.shape

    TH = _pick_row_tile(H, W)
    nH = H // TH

    # Shard the batch across 2 TensorCores when possible (helps v7x; on
    # single-TC chips the extra "parallel" axis just iterates, negligible cost).
    NC = 2 if (B >= 2 and B % 2 == 0) else 1
    Bc = B // NC

    # Channel 0 is selected directly in the index_map -> no wrapper-side slice.
    in_spec = pl.BlockSpec((None, None, TH, W),
                           lambda c, b, h: (c * Bc + b, 0, h, 0))
    # Per-core resident accumulator blocks, written back once per core.
    out_spec = pl.BlockSpec((None, TH, W), lambda c, b, h: (c, 0, 0))

    sum_partials, cnt_partials = pl.pallas_call(
        _make_kernel(binary_targets),
        out_shape=(jax.ShapeDtypeStruct((NC, TH, W), jnp.float32),
                   jax.ShapeDtypeStruct((NC, TH, W), jnp.float32)),
        grid=(NC, Bc, nH),
        in_specs=[in_spec, in_spec],
        out_specs=(out_spec, out_spec),
        compiler_params=pltpu.CompilerParams(
            dimension_semantics=("parallel", "arbitrary", "arbitrary"),
            vmem_limit_bytes=32 * 1024 * 1024),
    )(inputs, target)

    # Tiny final reductions (scalar glue): BCE sum in f32, count exactly in i32.
    total = jnp.sum(sum_partials)
    count = jnp.sum(cnt_partials.astype(jnp.int32)).astype(jnp.float32)
    return total / count   # 0/0 -> NaN when no nonzero predictions (as in torch)


def _reference(inputs, target):
    """Pure-JAX reference matching torch: BCELoss(mean) over nonzero pred positions."""
    p = inputs[:, 0].astype(jnp.float32)
    t = target[:, 0].astype(jnp.float32)
    nz = (p != 0.0).astype(jnp.float32)
    log_p = jnp.maximum(jnp.log(p), -100.0)
    log_1mp = jnp.maximum(jnp.log(1.0 - p), -100.0)
    per = -(t * log_p + (1.0 - t) * log_1mp)
    return jnp.sum(per * nz) / jnp.sum(nz)


if __name__ == "__main__":
    key = jax.random.PRNGKey(0)
    k1, k2, k3, k4 = jax.random.split(key, 4)

    B, C, H, W = 2, 4, 16, 16

    # Channel 0 of `inputs` must look like probabilities, with some exact zeros
    # so the torch.nonzero selection path is exercised.
    probs = jax.random.uniform(k1, (B, H, W), dtype=jnp.float32,
                               minval=1e-3, maxval=1.0 - 1e-3)
    keep = (jax.random.uniform(k2, (B, H, W)) > 0.3).astype(jnp.float32)
    pred_ch0 = probs * keep

    inputs = jax.random.uniform(k3, (B, C, H, W), dtype=jnp.float32)
    inputs = inputs.at[:, 0].set(pred_ch0)

    target = (jax.random.uniform(k4, (B, C, H, W)) > 0.5).astype(jnp.float32)

    loss = jax.block_until_ready(fakes_loss(inputs, target))
    ref = jax.block_until_ready(_reference(inputs, target))

    assert jnp.allclose(loss, ref, rtol=1e-5, atol=1e-5), (loss, ref)
    print("KERNEL_OK")
</pallas_src>

<mosaic_0001>
module attributes {stable_mosaic.version = 11 : i64} {
  func.func @kernel(%arg0: i32, %arg1: i32, %arg2: i32, %arg3: memref<1x1x16x16xf32, #tpu.memory_space<vmem>>, %arg4: memref<1x1x16x16xf32, #tpu.memory_space<vmem>>, %arg5: memref<1x16x16xf32, #tpu.memory_space<vmem>>, %arg6: memref<1x16x16xf32, #tpu.memory_space<vmem>>) attributes {dimension_semantics = [#tpu.dimension_semantics<parallel>, #tpu.dimension_semantics<arbitrary>, #tpu.dimension_semantics<arbitrary>], iteration_bounds = array<i64: 2, 1, 1>, scalar_prefetch = 0 : i64, scratch_operands = 0 : i64, tpu.core_type = #tpu.core_type<tc>, window_params = [{transform_indices = @transform_0, window_bounds = array<i64: 1, 1, 16, 16>}, {transform_indices = @transform_1, window_bounds = array<i64: 1, 1, 16, 16>}, {transform_indices = @transform_2, window_bounds = array<i64: 1, 16, 16>}, {transform_indices = @transform_3, window_bounds = array<i64: 1, 16, 16>}]} {
    %c0_i32 = arith.constant 0 : i32
    %0 = arith.cmpi eq, %arg1, %c0_i32 : i32
    %c0_i32_0 = arith.constant 0 : i32
    %1 = arith.cmpi eq, %arg2, %c0_i32_0 : i32
    %2 = arith.andi %0, %1 : i1
    %3 = arith.extui %2 : i1 to i32
    %c0_i32_1 = arith.constant 0 : i32
    %4 = arith.cmpi ne, %3, %c0_i32_1 : i32
    scf.if %4 {
      %cst_26 = arith.constant 0.000000e+00 : f32
      %41 = vector.broadcast %cst_26 : f32 to vector<16x16xf32>
      %c0_27 = arith.constant 0 : index
      %c0_28 = arith.constant 0 : index
      %c0_29 = arith.constant 0 : index
      %42 = vector.load %arg5[%c0_27, %c0_28, %c0_29] : memref<1x16x16xf32, #tpu.memory_space<vmem>>, vector<1x16x16xf32>
      %43 = vector.shape_cast %42 : vector<1x16x16xf32> to vector<16x16xf32>
      %44 = vector.shape_cast %41 : vector<16x16xf32> to vector<1x16x16xf32>
      tpu.vector_store %arg5[%c0_27, %c0_28, %c0_29], %44 {strides = array<i32>} : memref<1x16x16xf32, #tpu.memory_space<vmem>>, vector<1x16x16xf32>,
      %cst_30 = arith.constant 0.000000e+00 : f32
      %45 = vector.broadcast %cst_30 : f32 to vector<16x16xf32>
      %c0_31 = arith.constant 0 : index
      %c0_32 = arith.constant 0 : index
      %c0_33 = arith.constant 0 : index
      %46 = vector.load %arg6[%c0_31, %c0_32, %c0_33] : memref<1x16x16xf32, #tpu.memory_space<vmem>>, vector<1x16x16xf32>
      %47 = vector.shape_cast %46 : vector<1x16x16xf32> to vector<16x16xf32>
      %48 = vector.shape_cast %45 : vector<16x16xf32> to vector<1x16x16xf32>
      tpu.vector_store %arg6[%c0_31, %c0_32, %c0_33], %48 {strides = array<i32>} : memref<1x16x16xf32, #tpu.memory_space<vmem>>, vector<1x16x16xf32>,
    } else {
    }
    %c0 = arith.constant 0 : index
    %c0_2 = arith.constant 0 : index
    %c0_3 = arith.constant 0 : index
    %c0_4 = arith.constant 0 : index
    %5 = vector.load %arg3[%c0, %c0_2, %c0_3, %c0_4] : memref<1x1x16x16xf32, #tpu.memory_space<vmem>>, vector<1x1x16x16xf32>
    %6 = vector.shape_cast %5 : vector<1x1x16x16xf32> to vector<16x16xf32>
    %c0_5 = arith.constant 0 : index
    %c0_6 = arith.constant 0 : index
    %c0_7 = arith.constant 0 : index
    %c0_8 = arith.constant 0 : index
    %7 = vector.load %arg4[%c0_5, %c0_6, %c0_7, %c0_8] : memref<1x1x16x16xf32, #tpu.memory_space<vmem>>, vector<1x1x16x16xf32>
    %8 = vector.shape_cast %7 : vector<1x1x16x16xf32> to vector<16x16xf32>
    %cst = arith.constant 0.000000e+00 : f32
    %9 = vector.broadcast %cst : f32 to vector<16x16xf32>
    %10 = arith.cmpf one, %6, %9 : vector<16x16xf32>
    %11 = arith.extui %10 : vector<16x16xi1> to vector<16x16xi32>
    %12 = arith.sitofp %11 : vector<16x16xi32> to vector<16x16xf32>
    %13 = math.log %6 : vector<16x16xf32>
    %cst_9 = arith.constant -1.000000e+02 : f32
    %14 = vector.broadcast %cst_9 : f32 to vector<16x16xf32>
    %15 = arith.maximumf %13, %14 : vector<16x16xf32>
    %cst_10 = arith.constant 1.000000e+00 : f32
    %16 = vector.broadcast %cst_10 : f32 to vector<16x16xf32>
    %17 = arith.subf %16, %6 : vector<16x16xf32>
    %18 = math.log %17 : vector<16x16xf32>
    %cst_11 = arith.constant -1.000000e+02 : f32
    %19 = vector.broadcast %cst_11 : f32 to vector<16x16xf32>
    %20 = arith.maximumf %18, %19 : vector<16x16xf32>
    %21 = arith.mulf %8, %15 : vector<16x16xf32>
    %cst_12 = arith.constant 1.000000e+00 : f32
    %22 = vector.broadcast %cst_12 : f32 to vector<16x16xf32>
    %23 = arith.subf %22, %8 : vector<16x16xf32>
    %24 = arith.mulf %23, %20 : vector<16x16xf32>
    %25 = arith.addf %21, %24 : vector<16x16xf32>
    %cst_13 = arith.constant 0.000000e+00 : f32
    %26 = vector.broadcast %cst_13 : f32 to vector<16x16xf32>
    %27 = arith.subf %26, %25 : vector<16x16xf32>
    %c0_14 = arith.constant 0 : index
    %c0_15 = arith.constant 0 : index
    %c0_16 = arith.constant 0 : index
    %28 = vector.load %arg5[%c0_14, %c0_15, %c0_16] : memref<1x16x16xf32, #tpu.memory_space<vmem>>, vector<1x16x16xf32>
    %29 = vector.shape_cast %28 : vector<1x16x16xf32> to vector<16x16xf32>
    %30 = arith.mulf %27, %12 : vector<16x16xf32>
    %31 = arith.addf %29, %30 : vector<16x16xf32>
    %c0_17 = arith.constant 0 : index
    %c0_18 = arith.constant 0 : index
    %c0_19 = arith.constant 0 : index
    %32 = vector.load %arg5[%c0_17, %c0_18, %c0_19] : memref<1x16x16xf32, #tpu.memory_space<vmem>>, vector<1x16x16xf32>
    %33 = vector.shape_cast %32 : vector<1x16x16xf32> to vector<16x16xf32>
    %34 = vector.shape_cast %31 : vector<16x16xf32> to vector<1x16x16xf32>
    tpu.vector_store %arg5[%c0_17, %c0_18, %c0_19], %34 {strides = array<i32>} : memref<1x16x16xf32, #tpu.memory_space<vmem>>, vector<1x16x16xf32>,
    %c0_20 = arith.constant 0 : index
    %c0_21 = arith.constant 0 : index
    %c0_22 = arith.constant 0 : index
    %35 = vector.load %arg6[%c0_20, %c0_21, %c0_22] : memref<1x16x16xf32, #tpu.memory_space<vmem>>, vector<1x16x16xf32>
    %36 = vector.shape_cast %35 : vector<1x16x16xf32> to vector<16x16xf32>
    %37 = arith.addf %36, %12 : vector<16x16xf32>
    %c0_23 = arith.constant 0 : index
    %c0_24 = arith.constant 0 : index
    %c0_25 = arith.constant 0 : index
    %38 = vector.load %arg6[%c0_23, %c0_24, %c0_25] : memref<1x16x16xf32, #tpu.memory_space<vmem>>, vector<1x16x16xf32>
    %39 = vector.shape_cast %38 : vector<1x16x16xf32> to vector<16x16xf32>
    %40 = vector.shape_cast %37 : vector<16x16xf32> to vector<1x16x16xf32>
    tpu.vector_store %arg6[%c0_23, %c0_24, %c0_25], %40 {strides = array<i32>} : memref<1x16x16xf32, #tpu.memory_space<vmem>>, vector<1x16x16xf32>,
    return
  }
  func.func @transform_0(%arg0: i32, %arg1: i32, %arg2: i32) -> (i32, i32, i32, i32) {
    %c1_i32 = arith.constant 1 : i32
    %0 = arith.muli %arg0, %c1_i32 : i32
    %1 = arith.addi %0, %arg1 : i32
    %c0_i32 = arith.constant 0 : i32
    %c0_i32_0 = arith.constant 0 : i32
    %c0_i32_1 = arith.constant 0 : i32
    return %1, %c0_i32, %arg2, %c0_i32_0 : i32, i32, i32, i32
  }
  func.func @transform_1(%arg0: i32, %arg1: i32, %arg2: i32) -> (i32, i32, i32, i32) {
    %c1_i32 = arith.constant 1 : i32
    %0 = arith.muli %arg0, %c1_i32 : i32
    %1 = arith.addi %0, %arg1 : i32
    %c0_i32 = arith.constant 0 : i32
    %c0_i32_0 = arith.constant 0 : i32
    %c0_i32_1 = arith.constant 0 : i32
    return %1, %c0_i32, %arg2, %c0_i32_0 : i32, i32, i32, i32
  }
  func.func @transform_2(%arg0: i32, %arg1: i32, %arg2: i32) -> (i32, i32, i32) {
    %c0_i32 = arith.constant 0 : i32
    %c0_i32_0 = arith.constant 0 : i32
    %c0_i32_1 = arith.constant 0 : i32
    return %arg0, %c0_i32, %c0_i32_0 : i32, i32, i32
  }
  func.func @transform_3(%arg0: i32, %arg1: i32, %arg2: i32) -> (i32, i32, i32) {
    %c0_i32 = arith.constant 0 : i32
    %c0_i32_0 = arith.constant 0 : i32
    %c0_i32_1 = arith.constant 0 : i32
    return %arg0, %c0_i32, %c0_i32_0 : i32, i32, i32
  }
}

</mosaic_0001>

<llo_original>
// kernel: tpu_custom_call.1
$region0: #{tpu_custom_call.1}
  #allocation0 [shape = 'u32[]', space=smem, size = 0x4, offset = 0x4, fixed_abs, tag = 'smem constant byte address 0x4 - core index']
  #allocation1 [shape = 'u32[72,128]{1,0:T(1,128)}', space=vmem, size = 0x9000, scoped, tag = 'internal scratch']
  %s0 = inlined_call_operand.hbm [shape: f32[2,4,16,16], index: 0, kind: input, shape index: {}]
  %s1 = inlined_call_operand.hbm [shape: f32[2,4,16,16], index: 1, kind: input, shape index: {}]
  %s2 = inlined_call_operand.hbm [shape: f32[2,16,16], index: 2, kind: output, shape index: {0}]
  %s3 = inlined_call_operand.hbm [shape: f32[2,16,16], index: 3, kind: output, shape index: {1}]
  %4 = xla_tuple %s2, %s3
  %s5 = sld [smem:[#allocation0]]
  $region61: #{tpu_custom_call.1} parent=0
    _
  %s7 = ssub.s32 1, %s5
  %s8 = scalar_select 0, %s7, %s5
  $region1: #{tpu_custom_call.1} parent=0
    #allocation2 [shape = 'u8[16384]{0}', space=vmem, size = 0x4000, scoped, tag = 'input window, operand 0']
    #allocation3 [shape = 's32[2]{0}', space=sflag, size = 0x8, scoped, tag = 'scoped memory for tpu_custom_call.1']
    #allocation4 [shape = 's32[2]{0}', space=sflag, size = 0x8, scoped, tag = 'scoped memory for tpu_custom_call.1']
    #allocation5 [shape = 'u8[16384]{0}', space=vmem, size = 0x4000, scoped, tag = 'input window, operand 1']
    #allocation6 [shape = 's32[2]{0}', space=sflag, size = 0x8, scoped, tag = 'scoped memory for tpu_custom_call.1']
    #allocation7 [shape = 'u8[16384]{0}', space=vmem, size = 0x4000, scoped, tag = 'output window, operand 0']
    #allocation8 [shape = 'u8[16384]{0}', space=vmem, size = 0x4000, scoped, tag = 'output window, operand 1']
    #allocation9 [shape = 's32[2]{0}', space=sflag, size = 0x8, scoped, tag = 'scoped memory for tpu_custom_call.1']
    %9 = vsyncpa [#allocation3], 0
    %s10 = scalar_lea.sflag [#allocation3], 1
    %11 = vsyncpa %s10, 0
    %12 = vsyncpa [#allocation6], 0
    %s13 = scalar_lea.sflag [#allocation6], 1
    %14 = vsyncpa %s13, 0
    %15 = vsyncpa [#allocation4], 0
    %s16 = scalar_lea.sflag [#allocation4], 1
    %17 = vsyncpa %s16, 0
    %18 = vsyncpa [#allocation9], 0
    %s19 = scalar_lea.sflag [#allocation9], 1
    %20 = vsyncpa %s19, 0
    loop: start=0, step=1, limit=4
    $region2: #{tpu_custom_call.1} parent=1 // loop_pre_header
      _
    $region3: #{tpu_custom_call.1} parent=1 // loop_header
      %s22 = sphi 0, %s26
      %p23 = scmp.ge.s32.totalorder %s22, 4
      %s29 = sphi 0, %s48
      %s30 = sphi 0, %s44
      %s31 = sphi 0, %s40
      %s32 = sphi 0, %s29
      %s33 = sphi 0, %s30
      %s34 = sphi 0, %s31
      %s35 = sphi 0, %s32
      %s36 = sphi 0, %s33
      %s37 = sphi 0, %s34
      %s55 = sphi 0, %s57
      %s58 = sphi 0, %s55
      %s59 = sphi 0, %s58
      %s75 = sphi 0, %s59
      %s85 = sphi 0, %s87
      %s88 = sphi 0, %s85
      %s89 = sphi 0, %s88
      %s105 = sphi 0, %s89
      %s111 = sphi 0, %s113
      %s114 = sphi 0, %s111
      %s115 = sphi 0, %s114
      %s131 = sphi 0, %s115
      %s137 = sphi 0, %s139
      %s140 = sphi 0, %s137
      %s141 = sphi 0, %s140
      %s157 = sphi 0, %s141
    $region4: #{tpu_custom_call.1} parent=1 // loop_header_branch
      %25 = sbr.rel (%p23) target = $region8
    $region5: #{tpu_custom_call.1} parent=1 // loop_body
      %s27 = ssub.s32 %s22, 1
      %s28 = ssub.s32 %s22, 2
      %s38 = sadd.s32 1, %s31
      %p39 = scmp.ge.s32.totalorder %s38, 1
      %s40 = scalar_select %p39, 0, %s38
      %s41 = sadd.s32 1, %s30
      %s42 = scalar_select %p39, %s41, %s30
      %p43 = scmp.ge.s32.totalorder %s42, 1
      %s44 = scalar_select %p43, 0, %s42
      %s45 = sadd.s32 1, %s29
      %s46 = scalar_select %p43, %s45, %s29
      %p47 = scmp.ge.s32.totalorder %s46, 2
      %s48 = scalar_select %p47, 0, %s46
      %s49 = sadd.s32 %s29, %s30
      %s50 = sadd.s32 %s48, %s44
      %s51 = ssub.s32 %s49, %s50
      %s52 = ssub.s32 %s31, %s40
      %s53 = sor.u32 %s51, %s52
      %p54 = scmp.eq.s32.totalorder %s53, 0
      %s56 = sadd.s32 %s55, 1
      %s57 = scalar_select %p54, %s55, %s56
      %p60 = pneg %p54
      %p61 = scmp.eq.s32.totalorder %s22, 1
      %p62 = por %p60, %p61
      %p63 = scmp.ne.s32.totalorder %s55, %s58
      %p64 = scmp.eq.s32.totalorder %s22, 0
      %p65 = por %p63, %p64
      %p66 = scmp.ne.s32.totalorder %s55, %s58
      %p67 = scmp.eq.s32.totalorder %s27, 1
      %p68 = por %p66, %p67
      %p69 = scmp.ne.s32.totalorder %s58, %s59
      %p70 = scmp.eq.s32.totalorder %s27, 0
      %p71 = por %p69, %p70
      %p72 = scmp.ne.s32.totalorder %s58, %s59
      %p73 = scmp.eq.s32.totalorder %s28, 1
      %p74 = por %p72, %p73
      %p76 = scmp.ne.s32.totalorder %s59, %s75
      %p77 = scmp.eq.s32.totalorder %s28, 0
      %p78 = por %p76, %p77
      %s79 = sadd.s32 %s29, %s30
      %s80 = sadd.s32 %s48, %s44
      %s81 = ssub.s32 %s79, %s80
      %s82 = ssub.s32 %s31, %s40
      %s83 = sor.u32 %s81, %s82
      %p84 = scmp.eq.s32.totalorder %s83, 0
      %s86 = sadd.s32 %s85, 1
      %s87 = scalar_select %p84, %s85, %s86
      %p90 = pneg %p84
      %p91 = scmp.eq.s32.totalorder %s22, 1
      %p92 = por %p90, %p91
      %p93 = scmp.ne.s32.totalorder %s85, %s88
      %p94 = scmp.eq.s32.totalorder %s22, 0
      %p95 = por %p93, %p94
      %p96 = scmp.ne.s32.totalorder %s85, %s88
      %p97 = scmp.eq.s32.totalorder %s27, 1
      %p98 = por %p96, %p97
      %p99 = scmp.ne.s32.totalorder %s88, %s89
      %p100 = scmp.eq.s32.totalorder %s27, 0
      %p101 = por %p99, %p100
      %p102 = scmp.ne.s32.totalorder %s88, %s89
      %p103 = scmp.eq.s32.totalorder %s28, 1
      %p104 = por %p102, %p103
      %p106 = scmp.ne.s32.totalorder %s89, %s105
      %p107 = scmp.eq.s32.totalorder %s28, 0
      %p108 = por %p106, %p107
      %s109 = ssub.s32 %s29, %s48
      %p110 = scmp.eq.s32.totalorder %s109, 0
      %s112 = sadd.s32 %s111, 1
      %s113 = scalar_select %p110, %s111, %s112
      %p116 = pneg %p110
      %p117 = scmp.eq.s32.totalorder %s22, 1
      %p118 = por %p116, %p117
      %p119 = scmp.ne.s32.totalorder %s111, %s114
      %p120 = scmp.eq.s32.totalorder %s22, 0
      %p121 = por %p119, %p120
      %p122 = scmp.ne.s32.totalorder %s111, %s114
      %p123 = scmp.eq.s32.totalorder %s27, 1
      %p124 = por %p122, %p123
      %p125 = scmp.ne.s32.totalorder %s114, %s115
      %p126 = scmp.eq.s32.totalorder %s27, 0
      %p127 = por %p125, %p126
      %p128 = scmp.ne.s32.totalorder %s114, %s115
      %p129 = scmp.eq.s32.totalorder %s28, 1
      %p130 = por %p128, %p129
      %p132 = scmp.ne.s32.totalorder %s115, %s131
      %p133 = scmp.eq.s32.totalorder %s28, 0
      %p134 = por %p132, %p133
      %s135 = ssub.s32 %s29, %s48
      %p136 = scmp.eq.s32.totalorder %s135, 0
      %s138 = sadd.s32 %s137, 1
      %s139 = scalar_select %p136, %s137, %s138
      %p142 = pneg %p136
      %p143 = scmp.eq.s32.totalorder %s22, 1
      %p144 = por %p142, %p143
      %p145 = scmp.ne.s32.totalorder %s137, %s140
      %p146 = scmp.eq.s32.totalorder %s22, 0
      %p147 = por %p145, %p146
      %p148 = scmp.ne.s32.totalorder %s137, %s140
      %p149 = scmp.eq.s32.totalorder %s27, 1
      %p150 = por %p148, %p149
      %p151 = scmp.ne.s32.totalorder %s140, %s141
      %p152 = scmp.eq.s32.totalorder %s27, 0
      %p153 = por %p151, %p152
      %p154 = scmp.ne.s32.totalorder %s140, %s141
      %p155 = scmp.eq.s32.totalorder %s28, 1
      %p156 = por %p154, %p155
      %p158 = scmp.ne.s32.totalorder %s141, %s157
      %p159 = scmp.eq.s32.totalorder %s28, 0
      %p160 = por %p158, %p159
      %p161 = scmp.le.s32.totalorder 1, %s22
      %p162 = scmp.lt.s32.totalorder %s22, 3
      %p163 = pnand %p161, %p162
      %p164 = pneg %p163
      // Predicated region
      $region9: #{tpu_custom_call.1} parent=5 // pred_check
        _
      $region10: #{tpu_custom_call.1} parent=5 // pred_check_branch
        %166 = sbr.rel (%p163) target = $region12
      $region11: #{tpu_custom_call.1} parent=5 // pred_region
        %s167 = ssub.s32 %s22, 1
      $region12: #{tpu_custom_call.1} parent=5 // pred_fallthru
        _
      %p168 = scmp.lt.s32.totalorder %s22, 2
      // Predicated region
      $region13: #{tpu_custom_call.1} parent=5 // pred_check
        %p169 = pneg %p168
      $region14: #{tpu_custom_call.1} parent=5 // pred_check_branch
        %171 = sbr.rel (%p169) target = $region16
      $region15: #{tpu_custom_call.1} parent=5 // pred_region
        // Predicated region
        $region17: #{tpu_custom_call.1} parent=15 // pred_check
          %p172 = pneg %p65
        $region18: #{tpu_custom_call.1} parent=15 // pred_check_branch
          %174 = sbr.rel (%p172) target = $region20
        $region19: #{tpu_custom_call.1} parent=15 // pred_region
          %s175 = sand.u32 %s55, 1
          %s176 = scalar_lea.sflag [#allocation3], %s175
          %s177 = sand.u32 %s55, 1
          %s178 = smul.addr %s177, 16
          %s179 = scalar_lea.vmem [#allocation2], %s178
          %s180 = sadd.s32 %s29, %s30
          %s181 = smul.u32 2, %s31
          %183 = vsyncadd %s176, 0
          %s184 = smul.addr %s180, 8
          %s185 = sadd.s32 %s181, %s184
          %s186 = smul.addr %s185, 8
          %s187 = scalar_lea.hbm %s0, %s186
          %s188 = sshll.u32 %s187, 4
          %s189 = int_to_ptr.hbm [resolvable:$true] %s188
          %s190 = sshll.u32 %s179, 4
          %s191 = int_to_ptr.vmem [resolvable:$true] %s190
          %196 = dma.hbm_to_vmem [thread:$0]  %s189, 256, %s191, %s176, 128, 128, 8
        $region20: #{tpu_custom_call.1} parent=15 // pred_fallthru
          _
        // Predicated region
        $region21: #{tpu_custom_call.1} parent=15 // pred_check
          %p197 = pneg %p95
        $region22: #{tpu_custom_call.1} parent=15 // pred_check_branch
          %199 = sbr.rel (%p197) target = $region24
        $region23: #{tpu_custom_call.1} parent=15 // pred_region
          %s200 = sand.u32 %s85, 1
          %s201 = scalar_lea.sflag [#allocation6], %s200
          %s202 = sand.u32 %s85, 1
          %s203 = smul.addr %s202, 16
          %s204 = scalar_lea.vmem [#allocation5], %s203
          %s205 = sadd.s32 %s29, %s30
          %s206 = smul.u32 2, %s31
          %208 = vsyncadd %s201, 0
          %s209 = smul.addr %s205, 8
          %s210 = sadd.s32 %s206, %s209
          %s211 = smul.addr %s210, 8
          %s212 = scalar_lea.hbm %s1, %s211
          %s213 = sshll.u32 %s212, 4
          %s214 = int_to_ptr.hbm [resolvable:$true] %s213
          %s215 = sshll.u32 %s204, 4
          %s216 = int_to_ptr.vmem [resolvable:$true] %s215
          %221 = dma.hbm_to_vmem [thread:$0]  %s214, 256, %s216, %s201, 128, 128, 8
        $region24: #{tpu_custom_call.1} parent=15 // pred_fallthru
          _
      $region16: #{tpu_custom_call.1} parent=5 // pred_fallthru
        _
      %p222 = scmp.le.s32.totalorder 1, %s22
      %p223 = scmp.lt.s32.totalorder %s22, 3
      %p224 = pnand %p222, %p223
      %p225 = pneg %p224
      // Predicated region
      $region25: #{tpu_custom_call.1} parent=5 // pred_check
        _
      $region26: #{tpu_custom_call.1} parent=5 // pred_check_branch
        %227 = sbr.rel (%p224) target = $region28
      $region27: #{tpu_custom_call.1} parent=5 // pred_region
        %s228 = ssub.s32 %s22, 1
        %s229 = sand.u32 %s58, 1
        %s230 = scalar_lea.sflag [#allocation3], %s229
        %s231 = sand.u32 %s58, 1
        %s232 = smul.addr %s231, 16
        %s233 = scalar_lea.vmem [#allocation2], %s232
        // Predicated region
        $region29: #{tpu_custom_call.1} parent=27 // pred_check
          %p234 = pneg %p71
        $region30: #{tpu_custom_call.1} parent=27 // pred_check_branch
          %236 = sbr.rel (%p234) target = $region32
        $region31: #{tpu_custom_call.1} parent=27 // pred_region
          %238 = dma.done %s230, 256
        $region32: #{tpu_custom_call.1} parent=27 // pred_fallthru
          _
        %s239 = sand.u32 %s88, 1
        %s240 = scalar_lea.sflag [#allocation6], %s239
        %s241 = sand.u32 %s88, 1
        %s242 = smul.addr %s241, 16
        %s243 = scalar_lea.vmem [#allocation5], %s242
        // Predicated region
        $region33: #{tpu_custom_call.1} parent=27 // pred_check
          %p244 = pneg %p101
        $region34: #{tpu_custom_call.1} parent=27 // pred_check_branch
          %246 = sbr.rel (%p244) target = $region36
        $region35: #{tpu_custom_call.1} parent=27 // pred_region
          %248 = dma.done %s240, 256
        $region36: #{tpu_custom_call.1} parent=27 // pred_fallthru
          _
        %s249 = sand.u32 %s58, 1
        %s250 = scalar_lea.sflag [#allocation3], %s249
        %s251 = sand.u32 %s58, 1
        %s252 = smul.addr %s251, 16
        %s253 = scalar_lea.vmem [#allocation2], %s252
        %p254 = pneg %p71
        %p255 = pneg %p68
        %s256 = sand.u32 %s88, 1
        %s257 = scalar_lea.sflag [#allocation6], %s256
        %s258 = sand.u32 %s88, 1
        %s259 = smul.addr %s258, 16
        %s260 = scalar_lea.vmem [#allocation5], %s259
        %p261 = pneg %p101
        %p262 = pneg %p98
        %p263 = pneg %p127
        %p264 = pneg %p124
        %s265 = sand.u32 %s114, 1
        %s266 = scalar_lea.sflag [#allocation4], %s265
        %s267 = sand.u32 %s114, 1
        %s268 = smul.addr %s267, 16
        %s269 = scalar_lea.vmem [#allocation7], %s268
        %p270 = pneg %p153
        %p271 = pneg %p150
        %s272 = sand.u32 %s140, 1
        %s273 = scalar_lea.sflag [#allocation9], %s272
        %s274 = sand.u32 %s140, 1
        %s275 = smul.addr %s274, 16
        %s276 = scalar_lea.vmem [#allocation8], %s275
        %s277 = sadd.s32 %s32, %s33
        %s278 = smul.u32 2, %s34
        %s279 = sadd.s32 %s32, %s33
        %s280 = smul.u32 2, %s34
        %p281 = scmp.eq.s32.totalorder %s33, 0
        %p282 = scmp.eq.s32.totalorder %s34, 0
        %p283 = pnand %p281, %p282
        %p284 = pneg %p283
        // Predicated region
        $region37: #{tpu_custom_call.1} parent=27 // pred_check
          _
        $region38: #{tpu_custom_call.1} parent=27 // pred_check_branch
          %286 = sbr.rel (%p283) target = $region40
        $region39: #{tpu_custom_call.1} parent=27 // pred_region
          %vm287 = vcmask 130048
          %288 = vst.msk [vmem:[%s269] sm:$0xff] %vm287, 0.0
          %289 = vst.msk [vmem:[%s269 + $0x8] sm:$0xff] %vm287, 0.0
          %290 = vst.msk [vmem:[%s276] sm:$0xff] %vm287, 0.0
          %291 = vst.msk [vmem:[%s276 + $0x8] sm:$0xff] %vm287, 0.0
        $region40: #{tpu_custom_call.1} parent=27 // pred_fallthru
          _
        %v292 = vld [vmem:[%s233] sm:$0xff]
        %v293 = vld [vmem:[%s233 + $0x8] sm:$0xff]
        %v294 = vld [vmem:[%s243] sm:$0xff]
        %v295 = vld [vmem:[%s243 + $0x8] sm:$0xff]
        %vm296 = vcmp.ne.f32.partialorder %v292, 0.0
        %vm297 = vcmp.ne.f32.partialorder %v293, 0.0
        %v298 = vsel %vm296, 1, 0
        %v299 = vsel %vm297, 1, 0
        %v300 = vcvt.s32.f32 %v298
        %v301 = vcvt.s32.f32 %v299
        %v302 = vlog2.pop %v292
        %v303 = vmul.f32 %v302, 0.6931472
        %v304 = vlog2.pop %v293
        %v305 = vmul.f32 %v304, 0.6931472
        %v306 = vmax.f32 %v303, -100.0
        %v307 = vmax.f32 %v305, -100.0
        %v308 = vsub.f32 1.0, %v292
        %v309 = vsub.f32 1.0, %v293
        %v310 = vlog2.pop %v308
        %v311 = vmul.f32 %v310, 0.6931472
        %v312 = vlog2.pop %v309
        %v313 = vmul.f32 %v312, 0.6931472
        %v314 = vmax.f32 %v311, -100.0
        %v315 = vmax.f32 %v313, -100.0
        %v316 = vmul.f32 %v294, %v306
        %v317 = vmul.f32 %v295, %v307
        %v318 = vsub.f32 1.0, %v294
        %v319 = vsub.f32 1.0, %v295
        %v320 = vmul.f32 %v318, %v314
        %v321 = vmul.f32 %v319, %v315
        %v322 = vadd.f32 %v316, %v320
        %v323 = vadd.f32 %v317, %v321
        %v324 = vsub.f32 0.0, %v322
        %v325 = vsub.f32 0.0, %v323
        %v326 = vld [vmem:[%s269] sm:$0xff]
        %v327 = vld [vmem:[%s269 + $0x8] sm:$0xff]
        %v328 = vmul.f32 %v324, %v300
        %v329 = vmul.f32 %v325, %v301
        %v330 = vadd.f32 %v326, %v328
        %v331 = vadd.f32 %v327, %v329
        %vm332 = vcmask 130048
        %333 = vst.msk [vmem:[%s269] sm:$0xff] %vm332, %v330
        %334 = vst.msk [vmem:[%s269 + $0x8] sm:$0xff] %vm332, %v331
        %v335 = vld [vmem:[%s276] sm:$0xff]
        %v336 = vld [vmem:[%s276 + $0x8] sm:$0xff]
        %v337 = vadd.f32 %v335, %v300
        %v338 = vadd.f32 %v336, %v301
        %339 = vst.msk [vmem:[%s276] sm:$0xff] %vm332, %v337
        %340 = vst.msk [vmem:[%s276 + $0x8] sm:$0xff] %vm332, %v338
        %s341 = sand.u32 %s114, 1
        %s342 = scalar_lea.sflag [#allocation4], %s341
        %s343 = sand.u32 %s114, 1
        %s344 = smul.addr %s343, 16
        %s345 = scalar_lea.vmem [#allocation7], %s344
        %s346 = sand.u32 %s140, 1
        %s347 = scalar_lea.sflag [#allocation9], %s346
        %s348 = sand.u32 %s140, 1
        %s349 = smul.addr %s348, 16
        %s350 = scalar_lea.vmem [#allocation8], %s349
        // Predicated region
        $region41: #{tpu_custom_call.1} parent=27 // pred_check
          %p351 = pneg %p124
        $region42: #{tpu_custom_call.1} parent=27 // pred_check_branch
          %353 = sbr.rel (%p351) target = $region44
        $region43: #{tpu_custom_call.1} parent=27 // pred_region
          %355 = vsyncadd %s342, 0
          %s356 = smul.addr %s32, 2
          %s357 = smul.addr %s356, 8
          %s358 = scalar_lea.hbm %s2, %s357
          %s359 = sshll.u32 %s345, 4
          %s360 = int_to_ptr.vmem [resolvable:$true] %s359
          %s361 = sshll.u32 %s358, 4
          %s362 = int_to_ptr.hbm [resolvable:$true] %s361
          %367 = dma.vmem_to_hbm [thread:$0]  %s360, 256, %s362, %s342, 128, 128, 8
        $region44: #{tpu_custom_call.1} parent=27 // pred_fallthru
          _
        // Predicated region
        $region45: #{tpu_custom_call.1} parent=27 // pred_check
          %p368 = pneg %p150
        $region46: #{tpu_custom_call.1} parent=27 // pred_check_branch
          %370 = sbr.rel (%p368) target = $region48
        $region47: #{tpu_custom_call.1} parent=27 // pred_region
          %372 = vsyncadd %s347, 0
          %s373 = smul.addr %s32, 2
          %s374 = smul.addr %s373, 8
          %s375 = scalar_lea.hbm %s3, %s374
          %s376 = sshll.u32 %s350, 4
          %s377 = int_to_ptr.vmem [resolvable:$true] %s376
          %s378 = sshll.u32 %s375, 4
          %s379 = int_to_ptr.hbm [resolvable:$true] %s378
          %384 = dma.vmem_to_hbm [thread:$0]  %s377, 256, %s379, %s347, 128, 128, 8
        $region48: #{tpu_custom_call.1} parent=27 // pred_fallthru
          _
      $region28: #{tpu_custom_call.1} parent=5 // pred_fallthru
        _
      %p385 = scmp.le.s32.totalorder 2, %s22
      // Predicated region
      $region49: #{tpu_custom_call.1} parent=5 // pred_check
        %p386 = pneg %p385
      $region50: #{tpu_custom_call.1} parent=5 // pred_check_branch
        %388 = sbr.rel (%p386) target = $region52
      $region51: #{tpu_custom_call.1} parent=5 // pred_region
        %s389 = ssub.s32 %s22, 2
        // Predicated region
        $region53: #{tpu_custom_call.1} parent=51 // pred_check
          %p390 = pneg %p130
        $region54: #{tpu_custom_call.1} parent=51 // pred_check_branch
          %392 = sbr.rel (%p390) target = $region56
        $region55: #{tpu_custom_call.1} parent=51 // pred_region
          %s393 = sand.u32 %s115, 1
          %s394 = scalar_lea.sflag [#allocation4], %s393
          %s395 = sand.u32 %s115, 1
          %s396 = smul.addr %s395, 16
          %s397 = scalar_lea.vmem [#allocation7], %s396
          %399 = dma.done %s394, 256
        $region56: #{tpu_custom_call.1} parent=51 // pred_fallthru
          _
        // Predicated region
        $region57: #{tpu_custom_call.1} parent=51 // pred_check
          %p400 = pneg %p156
        $region58: #{tpu_custom_call.1} parent=51 // pred_check_branch
          %402 = sbr.rel (%p400) target = $region60
        $region59: #{tpu_custom_call.1} parent=51 // pred_region
          %s403 = sand.u32 %s141, 1
          %s404 = scalar_lea.sflag [#allocation9], %s403
          %s405 = sand.u32 %s141, 1
          %s406 = smul.addr %s405, 16
          %s407 = scalar_lea.vmem [#allocation8], %s406
          %409 = dma.done %s404, 256
        $region60: #{tpu_custom_call.1} parent=51 // pred_fallthru
          _
      $region52: #{tpu_custom_call.1} parent=5 // pred_fallthru
        _
    $region6: #{tpu_custom_call.1} parent=1 // loop_footer
      %s26 = sadd.s32 1, %s22
    $region7: #{tpu_custom_call.1} parent=1 // loop_footer_branch
      %21 = sbr.rel target = $region3
    $region8: #{tpu_custom_call.1} parent=1 // loop_exit
      _
    %410 = vsyncpa [#allocation3], 1
    %s411 = scalar_lea.sflag [#allocation3], 1
    %412 = vsyncpa %s411, 1
    %413 = vsyncpa [#allocation6], 1
    %s414 = scalar_lea.sflag [#allocation6], 1
    %415 = vsyncpa %s414, 1
    %416 = vsyncpa [#allocation4], 1
    %s417 = scalar_lea.sflag [#allocation4], 1
    %418 = vsyncpa %s417, 1
    %419 = vsyncpa [#allocation9], 1
    %s420 = scalar_lea.sflag [#allocation9], 1
    %421 = vsyncpa %s420, 1

</llo_original>
